<compile_context>
chip_gen: v6e
topology: v6e:2x2x1
jax: 0.10.0
libtpu: 0.0.40
codegen_flags: <defaults>
</compile_context>

<pallas_src>
import functools

import jax
import jax.numpy as jnp
from jax.experimental import pallas as pl
from jax.experimental.pallas import tpu as pltpu

LANE = 128
SUBLANE = 8
BN_EPS = 1e-5


def _round_up(n, m):
    return ((n + m - 1) // m) * m


def _pad2d(a, rows, cols):
    return jnp.pad(a, ((0, rows - a.shape[0]), (0, cols - a.shape[1])))


def fold_batchnorm(params):
    """Fold eval-mode BatchNorm1d (applied after LeakyReLU2) into Linear3."""
    inv_std = 1.0 / jnp.sqrt(params["var"] + BN_EPS)       # (1, hsize)
    a = params["gamma"] * inv_std                          # per-feature scale
    c = params["beta"] - params["mean"] * a                # per-feature shift
    w3f = a.reshape(-1, 1) * params["w3"]                  # diag(a) @ W3
    b3f = c @ params["w3"] + params["b3"]                  # c @ W3 + b3
    return w3f, b3f


def encoder_kernel(x_ref, w1_ref, w2_ref, w3_ref, w4_ref, bias_ref, out_ref,
                   *, alpha):
    """One batch-tile of the fused 4-layer MLP.

    x_ref    : (TB, Qp)   bf16
    w1_ref   : (Qp, Hp)   bf16
    w2_ref   : (Hp, Hp)   bf16
    w3_ref   : (Hp, Hp)   bf16  (BatchNorm already folded in)
    w4_ref   : (Hp, Zp)   bf16
    bias_ref : (8, Wb)    f32   rows 0..3 = b1, b2, b3_folded, b4 (zero padded)
    out_ref  : (TB, Zp)   f32
    """
    bias = bias_ref[...]

    def leaky(v):
        return jnp.where(v > 0, v, alpha * v)

    # Linear1 + LeakyReLU
    h = jnp.dot(x_ref[...], w1_ref[...], preferred_element_type=jnp.float32)
    h = leaky(h + bias[0:1, :h.shape[1]])
    # TODO(synk): Dropout(p=0.3) omitted — eval-mode (identity) semantics only.

    # Linear2 + LeakyReLU (BatchNorm folded into Linear3 below)
    h = jnp.dot(h.astype(jnp.bfloat16), w2_ref[...],
                preferred_element_type=jnp.float32)
    h = leaky(h + bias[1:2, :h.shape[1]])

    # (BN-folded) Linear3 + LeakyReLU
    h = jnp.dot(h.astype(jnp.bfloat16), w3_ref[...],
                preferred_element_type=jnp.float32)
    h = leaky(h + bias[2:3, :h.shape[1]])

    # Linear4
    z = jnp.dot(h.astype(jnp.bfloat16), w4_ref[...],
                preferred_element_type=jnp.float32)
    out_ref[...] = (z + bias[3:4, :z.shape[1]]).astype(out_ref.dtype)


def encoder_forward(x, params, *, seq_len, aa_var, zdim, alpha):
    B = x.shape[0]
    q = seq_len * aa_var
    hsize = params["w2"].shape[0]

    # Lane-dense padded feature sizes.
    Qp = _round_up(q, LANE)
    Hp = _round_up(hsize, LANE)
    Zp = _round_up(zdim, LANE)
    Wb = max(Hp, Zp)

    # Batch tiling: tile rows a multiple of 8, capped at 128.
    if B <= 128:
        TB = _round_up(max(B, 1), SUBLANE)
        Bp = TB
    else:
        TB = 128
        Bp = _round_up(B, TB)

    w3f, b3f = fold_batchnorm(params)

    # Pack operands: bf16 matmul operands (padded), all biases in one f32 block.
    x2d = _pad2d(x.reshape(B, q), Bp, Qp).astype(jnp.bfloat16)
    w1 = _pad2d(params["w1"], Qp, Hp).astype(jnp.bfloat16)
    w2 = _pad2d(params["w2"], Hp, Hp).astype(jnp.bfloat16)
    w3 = _pad2d(w3f, Hp, Hp).astype(jnp.bfloat16)
    w4 = _pad2d(params["w4"], Hp, Zp).astype(jnp.bfloat16)

    bias_pack = jnp.zeros((SUBLANE, Wb), jnp.float32)
    bias_pack = bias_pack.at[0, :hsize].set(params["b1"][0])
    bias_pack = bias_pack.at[1, :hsize].set(params["b2"][0])
    bias_pack = bias_pack.at[2, :hsize].set(b3f[0])
    bias_pack = bias_pack.at[3, :zdim].set(params["b4"][0])

    flops = 2 * Bp * (Qp * Hp + 2 * Hp * Hp + Hp * Zp)
    bytes_accessed = (x2d.size + w1.size + w2.size + w3.size + w4.size) * 2 \
        + bias_pack.size * 4 + Bp * Zp * 4

    kern = functools.partial(encoder_kernel, alpha=alpha)
    out_p = pl.pallas_call(
        kern,
        out_shape=jax.ShapeDtypeStruct((Bp, Zp), jnp.float32),
        grid_spec=pltpu.PrefetchScalarGridSpec(
            num_scalar_prefetch=0,
            grid=(Bp // TB,),
            in_specs=[
                pl.BlockSpec((TB, Qp), lambda i: (i, 0)),       # x tile
                pl.BlockSpec((Qp, Hp), lambda i: (0, 0)),       # w1 (resident)
                pl.BlockSpec((Hp, Hp), lambda i: (0, 0)),       # w2
                pl.BlockSpec((Hp, Hp), lambda i: (0, 0)),       # w3 (BN folded)
                pl.BlockSpec((Hp, Zp), lambda i: (0, 0)),       # w4
                pl.BlockSpec((SUBLANE, Wb), lambda i: (0, 0)),  # packed biases
            ],
            out_specs=pl.BlockSpec((TB, Zp), lambda i: (i, 0)),
        ),
        compiler_params=pltpu.CompilerParams(
            dimension_semantics=("parallel",)),
        cost_estimate=pl.CostEstimate(
            flops=flops, transcendentals=0, bytes_accessed=bytes_accessed),
    )(x2d, w1, w2, w3, w4, bias_pack)

    return out_p[:B, :zdim]


def encoder_reference(x, params, *, seq_len, aa_var, alpha):
    """Pure-JAX f32 reference of the module's eval-mode forward (BN unfolded)."""
    B = x.shape[0]
    q = seq_len * aa_var
    h = x.reshape(B, q).astype(jnp.float32)

    def leaky(v):
        return jnp.where(v > 0, v, alpha * v)

    h = leaky(h @ params["w1"] + params["b1"])
    h = leaky(h @ params["w2"] + params["b2"])
    h = (h - params["mean"]) / jnp.sqrt(params["var"] + BN_EPS) \
        * params["gamma"] + params["beta"]
    h = leaky(h @ params["w3"] + params["b3"])
    return h @ params["w4"] + params["b4"]


def encoder_reference_bf16(x, params, *, seq_len, aa_var, alpha):
    """Reference mimicking the kernel's bf16 operands + folded BN (tight check)."""
    B = x.shape[0]
    q = seq_len * aa_var
    cast = lambda a: a.astype(jnp.bfloat16)

    def leaky(v):
        return jnp.where(v > 0, v, alpha * v)

    w3f, b3f = fold_batchnorm(params)
    h = x.reshape(B, q)
    h = leaky(jnp.dot(cast(h), cast(params["w1"]),
                      preferred_element_type=jnp.float32) + params["b1"])
    h = leaky(jnp.dot(cast(h), cast(params["w2"]),
                      preferred_element_type=jnp.float32) + params["b2"])
    h = leaky(jnp.dot(cast(h), cast(w3f),
                      preferred_element_type=jnp.float32) + b3f)
    return jnp.dot(cast(h), cast(params["w4"]),
                   preferred_element_type=jnp.float32) + params["b4"]


def init_params(key, q, hsize, zdim):
    ks = jax.random.split(key, 12)

    def lin(kw, kb, fan_in, fan_out):
        bound = 1.0 / jnp.sqrt(fan_in)
        w = jax.random.uniform(kw, (fan_in, fan_out), jnp.float32, -bound, bound)
        b = jax.random.uniform(kb, (1, fan_out), jnp.float32, -bound, bound)
        return w, b

    w1, b1 = lin(ks[0], ks[1], q, hsize)
    w2, b2 = lin(ks[2], ks[3], hsize, hsize)
    w3, b3 = lin(ks[4], ks[5], hsize, hsize)
    w4, b4 = lin(ks[6], ks[7], hsize, zdim)
    return {
        "w1": w1, "b1": b1,
        "w2": w2, "b2": b2,
        # Non-trivial BN buffers so the BN-folding path is actually exercised.
        "gamma": jax.random.uniform(ks[8], (1, hsize), jnp.float32, 0.5, 1.5),
        "beta": 0.1 * jax.random.normal(ks[9], (1, hsize), jnp.float32),
        "mean": 0.1 * jax.random.normal(ks[10], (1, hsize), jnp.float32),
        "var": jax.random.uniform(ks[11], (1, hsize), jnp.float32, 0.5, 1.5),
        "w3": w3, "b3": b3,
        "w4": w4, "b4": b4,
    }


if __name__ == "__main__":
    # Small shapes consistent with the module's constructor.
    seq_len, aa_var, zdim, alpha = 8, 4, 16, 0.1
    batch = 8
    q = seq_len * aa_var            # 32
    hsize = int(1.5 * q)            # 48

    key = jax.random.PRNGKey(0)
    kx, kp = jax.random.split(key)
    x = jax.random.normal(kx, (batch, seq_len, aa_var), jnp.float32)
    params = init_params(kp, q, hsize, zdim)

    out = encoder_forward(x, params, seq_len=seq_len, aa_var=aa_var,
                          zdim=zdim, alpha=alpha)
    out = jax.block_until_ready(out)
    assert out.shape == (batch, zdim)

    # Tight check: kernel vs. a reference that uses the same bf16 operands
    # and the same BN fold (differences are accumulation-order only).
    ref_bf16 = encoder_reference_bf16(x, params, seq_len=seq_len,
                                      aa_var=aa_var, alpha=alpha)
    assert jnp.allclose(out, ref_bf16, atol=1e-3, rtol=1e-3), \
        "mismatch vs bf16 reference"

    # Sanity check: kernel vs. the full-precision (f32, BN-unfolded) module
    # forward — only bf16 rounding separates them.
    ref_f32 = encoder_reference(x, params, seq_len=seq_len,
                                aa_var=aa_var, alpha=alpha)
    assert jnp.allclose(out, ref_f32, atol=5e-2, rtol=5e-2), \
        "mismatch vs f32 reference"

    print("KERNEL_OK")
</pallas_src>

<mosaic_0001>
module attributes {stable_mosaic.version = 11 : i64} {
  func.func @encoder_kernel(%arg0: i32, %arg1: memref<8x128xbf16, #tpu.memory_space<vmem>>, %arg2: memref<128x128xbf16, #tpu.memory_space<vmem>>, %arg3: memref<128x128xbf16, #tpu.memory_space<vmem>>, %arg4: memref<128x128xbf16, #tpu.memory_space<vmem>>, %arg5: memref<128x128xbf16, #tpu.memory_space<vmem>>, %arg6: memref<8x128xf32, #tpu.memory_space<vmem>>, %arg7: memref<8x128xf32, #tpu.memory_space<vmem>>) attributes {dimension_semantics = [#tpu.dimension_semantics<parallel>], iteration_bounds = array<i64: 1>, scalar_prefetch = 0 : i64, scratch_operands = 0 : i64, tpu.core_type = #tpu.core_type<tc>, window_params = [{transform_indices = @transform_0, window_bounds = array<i64: 8, 128>}, {pipeline_mode = #tpu.pipeline_mode<synchronous>, transform_indices = @transform_1, window_bounds = array<i64: 128, 128>}, {pipeline_mode = #tpu.pipeline_mode<synchronous>, transform_indices = @transform_2, window_bounds = array<i64: 128, 128>}, {pipeline_mode = #tpu.pipeline_mode<synchronous>, transform_indices = @transform_3, window_bounds = array<i64: 128, 128>}, {pipeline_mode = #tpu.pipeline_mode<synchronous>, transform_indices = @transform_4, window_bounds = array<i64: 128, 128>}, {pipeline_mode = #tpu.pipeline_mode<synchronous>, transform_indices = @transform_5, window_bounds = array<i64: 8, 128>}, {transform_indices = @transform_6, window_bounds = array<i64: 8, 128>}]} {
    %c0 = arith.constant 0 : index
    %c0_0 = arith.constant 0 : index
    %0 = vector.load %arg6[%c0, %c0_0] : memref<8x128xf32, #tpu.memory_space<vmem>>, vector<8x128xf32>
    %c0_1 = arith.constant 0 : index
    %c0_2 = arith.constant 0 : index
    %1 = vector.load %arg1[%c0_1, %c0_2] : memref<8x128xbf16, #tpu.memory_space<vmem>>, vector<8x128xbf16>
    %c0_3 = arith.constant 0 : index
    %c0_4 = arith.constant 0 : index
    %2 = vector.load %arg2[%c0_3, %c0_4] : memref<128x128xbf16, #tpu.memory_space<vmem>>, vector<128x128xbf16>
    %cst = arith.constant dense<0.000000e+00> : vector<8x128xf32>
    %3 = tpu.matmul %1, %2, %cst {dimension_numbers = #tpu.dot_dimension_numbers<[1], [0], [0], [1], [0, 0, 1, 1], [], []>} : vector<8x128xbf16>, vector<128x128xbf16>, vector<8x128xf32> -> vector<8x128xf32>
    %4 = vector.extract_strided_slice %0 {offsets = [0, 0], sizes = [1, 128], strides = [1, 1]} : vector<8x128xf32> to vector<1x128xf32>
    %5 = vector.broadcast %4 : vector<1x128xf32> to vector<8x128xf32>
    %6 = arith.addf %3, %5 : vector<8x128xf32>
    %cst_5 = arith.constant 0.000000e+00 : f32
    %7 = vector.broadcast %cst_5 : f32 to vector<8x128xf32>
    %8 = arith.cmpf ogt, %6, %7 : vector<8x128xf32>
    %cst_6 = arith.constant 1.000000e-01 : f32
    %9 = vector.broadcast %cst_6 : f32 to vector<8x128xf32>
    %10 = arith.mulf %9, %6 : vector<8x128xf32>
    %11 = arith.select %8, %6, %10 : vector<8x128xi1>, vector<8x128xf32>
    %12 = arith.truncf %11 : vector<8x128xf32> to vector<8x128xbf16>
    %c0_7 = arith.constant 0 : index
    %c0_8 = arith.constant 0 : index
    %13 = vector.load %arg3[%c0_7, %c0_8] : memref<128x128xbf16, #tpu.memory_space<vmem>>, vector<128x128xbf16>
    %cst_9 = arith.constant dense<0.000000e+00> : vector<8x128xf32>
    %14 = tpu.matmul %12, %13, %cst_9 {dimension_numbers = #tpu.dot_dimension_numbers<[1], [0], [0], [1], [0, 0, 1, 1], [], []>} : vector<8x128xbf16>, vector<128x128xbf16>, vector<8x128xf32> -> vector<8x128xf32>
    %15 = vector.extract_strided_slice %0 {offsets = [1, 0], sizes = [1, 128], strides = [1, 1]} : vector<8x128xf32> to vector<1x128xf32>
    %16 = vector.broadcast %15 : vector<1x128xf32> to vector<8x128xf32>
    %17 = arith.addf %14, %16 : vector<8x128xf32>
    %cst_10 = arith.constant 0.000000e+00 : f32
    %18 = vector.broadcast %cst_10 : f32 to vector<8x128xf32>
    %19 = arith.cmpf ogt, %17, %18 : vector<8x128xf32>
    %cst_11 = arith.constant 1.000000e-01 : f32
    %20 = vector.broadcast %cst_11 : f32 to vector<8x128xf32>
    %21 = arith.mulf %20, %17 : vector<8x128xf32>
    %22 = arith.select %19, %17, %21 : vector<8x128xi1>, vector<8x128xf32>
    %23 = arith.truncf %22 : vector<8x128xf32> to vector<8x128xbf16>
    %c0_12 = arith.constant 0 : index
    %c0_13 = arith.constant 0 : index
    %24 = vector.load %arg4[%c0_12, %c0_13] : memref<128x128xbf16, #tpu.memory_space<vmem>>, vector<128x128xbf16>
    %cst_14 = arith.constant dense<0.000000e+00> : vector<8x128xf32>
    %25 = tpu.matmul %23, %24, %cst_14 {dimension_numbers = #tpu.dot_dimension_numbers<[1], [0], [0], [1], [0, 0, 1, 1], [], []>} : vector<8x128xbf16>, vector<128x128xbf16>, vector<8x128xf32> -> vector<8x128xf32>
    %26 = vector.extract_strided_slice %0 {offsets = [2, 0], sizes = [1, 128], strides = [1, 1]} : vector<8x128xf32> to vector<1x128xf32>
    %27 = vector.broadcast %26 : vector<1x128xf32> to vector<8x128xf32>
    %28 = arith.addf %25, %27 : vector<8x128xf32>
    %cst_15 = arith.constant 0.000000e+00 : f32
    %29 = vector.broadcast %cst_15 : f32 to vector<8x128xf32>
    %30 = arith.cmpf ogt, %28, %29 : vector<8x128xf32>
    %cst_16 = arith.constant 1.000000e-01 : f32
    %31 = vector.broadcast %cst_16 : f32 to vector<8x128xf32>
    %32 = arith.mulf %31, %28 : vector<8x128xf32>
    %33 = arith.select %30, %28, %32 : vector<8x128xi1>, vector<8x128xf32>
    %34 = arith.truncf %33 : vector<8x128xf32> to vector<8x128xbf16>
    %c0_17 = arith.constant 0 : index
    %c0_18 = arith.constant 0 : index
    %35 = vector.load %arg5[%c0_17, %c0_18] : memref<128x128xbf16, #tpu.memory_space<vmem>>, vector<128x128xbf16>
    %cst_19 = arith.constant dense<0.000000e+00> : vector<8x128xf32>
    %36 = tpu.matmul %34, %35, %cst_19 {dimension_numbers = #tpu.dot_dimension_numbers<[1], [0], [0], [1], [0, 0, 1, 1], [], []>} : vector<8x128xbf16>, vector<128x128xbf16>, vector<8x128xf32> -> vector<8x128xf32>
    %37 = vector.extract_strided_slice %0 {offsets = [3, 0], sizes = [1, 128], strides = [1, 1]} : vector<8x128xf32> to vector<1x128xf32>
    %38 = vector.broadcast %37 : vector<1x128xf32> to vector<8x128xf32>
    %39 = arith.addf %36, %38 : vector<8x128xf32>
    %c0_20 = arith.constant 0 : index
    %c0_21 = arith.constant 0 : index
    %40 = vector.load %arg7[%c0_20, %c0_21] : memref<8x128xf32, #tpu.memory_space<vmem>>, vector<8x128xf32>
    tpu.vector_store %arg7[%c0_20, %c0_21], %39 {strides = array<i32>} : memref<8x128xf32, #tpu.memory_space<vmem>>, vector<8x128xf32>,
    return
  }
  func.func @transform_0(%arg0: i32) -> (i32, i32) {
    %c0_i32 = arith.constant 0 : i32
    %c0_i32_0 = arith.constant 0 : i32
    return %arg0, %c0_i32 : i32, i32
  }
  func.func @transform_1(%arg0: i32) -> (i32, i32) {
    %c0_i32 = arith.constant 0 : i32
    %c0_i32_0 = arith.constant 0 : i32
    %c0_i32_1 = arith.constant 0 : i32
    return %c0_i32, %c0_i32_0 : i32, i32
  }
  func.func @transform_2(%arg0: i32) -> (i32, i32) {
    %c0_i32 = arith.constant 0 : i32
    %c0_i32_0 = arith.constant 0 : i32
    %c0_i32_1 = arith.constant 0 : i32
    return %c0_i32, %c0_i32_0 : i32, i32
  }
  func.func @transform_3(%arg0: i32) -> (i32, i32) {
    %c0_i32 = arith.constant 0 : i32
    %c0_i32_0 = arith.constant 0 : i32
    %c0_i32_1 = arith.constant 0 : i32
    return %c0_i32, %c0_i32_0 : i32, i32
  }
  func.func @transform_4(%arg0: i32) -> (i32, i32) {
    %c0_i32 = arith.constant 0 : i32
    %c0_i32_0 = arith.constant 0 : i32
    %c0_i32_1 = arith.constant 0 : i32
    return %c0_i32, %c0_i32_0 : i32, i32
  }
  func.func @transform_5(%arg0: i32) -> (i32, i32) {
    %c0_i32 = arith.constant 0 : i32
    %c0_i32_0 = arith.constant 0 : i32
    %c0_i32_1 = arith.constant 0 : i32
    return %c0_i32, %c0_i32_0 : i32, i32
  }
  func.func @transform_6(%arg0: i32) -> (i32, i32) {
    %c0_i32 = arith.constant 0 : i32
    %c0_i32_0 = arith.constant 0 : i32
    return %arg0, %c0_i32 : i32, i32
  }
}

</mosaic_0001>

<llo_original>
// kernel: tpu_custom_call.1
$region0: #{tpu_custom_call.1}
  #allocation0 [shape = 'u32[]', space=smem, size = 0x4, offset = 0x4, fixed_abs, tag = 'smem constant byte address 0x4 - core index']
  #allocation1 [shape = 'u32[144,128]{1,0:T(1,128)}', space=vmem, size = 0x12000, scoped, tag = 'internal scratch']
  %s0 = inlined_call_operand.hbm [shape: bf16[8,128], index: 0, kind: input, shape index: {}]
  %s1 = inlined_call_operand.hbm [shape: bf16[128,128], index: 1, kind: input, shape index: {}]
  %s2 = inlined_call_operand.hbm [shape: bf16[128,128], index: 2, kind: input, shape index: {}]
  %s3 = inlined_call_operand.hbm [shape: bf16[128,128], index: 3, kind: input, shape index: {}]
  %s4 = inlined_call_operand.hbm [shape: bf16[128,128], index: 4, kind: input, shape index: {}]
  %s5 = inlined_call_operand.vmem [shape: f32[8,128], index: 5, kind: input, shape index: {}]
  %s6 = inlined_call_operand.hbm [shape: f32[8,128], index: 6, kind: output, shape index: {}]
  %s7 = sld [smem:[#allocation0]]
  $region54: #{tpu_custom_call.1} parent=0
    _
  %s9 = ssub.s32 1, %s7
  %s10 = scalar_select 0, %s9, %s7
  $region1: #{tpu_custom_call.1} parent=0
    #allocation2 [shape = 'u8[2048]{0}', space=vmem, size = 0x800, scoped, tag = 'input window, operand 0, single buffered']
    #allocation3 [shape = 's32[1]{0}', space=sflag, size = 0x4, scoped, tag = 'scoped memory for tpu_custom_call.1']
    #allocation4 [shape = 's32[1]{0}', space=sflag, size = 0x4, scoped, tag = 'scoped memory for tpu_custom_call.1']
    #allocation5 [shape = 'u8[32768]{0}', space=vmem, size = 0x8000, scoped, tag = 'input window, operand 1, single buffered']
    #allocation6 [shape = 's32[1]{0}', space=sflag, size = 0x4, scoped, tag = 'scoped memory for tpu_custom_call.1']
    #allocation7 [shape = 'u8[32768]{0}', space=vmem, size = 0x8000, scoped, tag = 'input window, operand 2, single buffered']
    #allocation8 [shape = 'u8[32768]{0}', space=vmem, size = 0x8000, scoped, tag = 'input window, operand 3, single buffered']
    #allocation9 [shape = 's32[1]{0}', space=sflag, size = 0x4, scoped, tag = 'scoped memory for tpu_custom_call.1']
    #allocation10 [shape = 'u8[32768]{0}', space=vmem, size = 0x8000, scoped, tag = 'input window, operand 4, single buffered']
    #allocation11 [shape = 'u8[4096]{0}', space=vmem, size = 0x1000, scoped, tag = 'output window, operand 0, single buffered']
    %11 = vsyncpa [#allocation3], 0
    %12 = vsyncpa [#allocation6], 0
    %13 = vsyncpa [#allocation9], 0
    %14 = vsyncpa [#allocation4], 0
    // Predicated region
    $region2: #{tpu_custom_call.1} parent=1 // pred_check
      _
    $region3: #{tpu_custom_call.1} parent=1 // pred_check_branch
      %16 = sbr.rel (0) target = $region5
    $region4: #{tpu_custom_call.1} parent=1 // pred_region
      %s18 = ssub.s32 64, 64
      %19 = vsyncadd [#allocation3], %s18
      %s21 = sshll.u32 [#allocation2], 4
      %s22 = int_to_ptr.vmem [resolvable:$true] %s21
      %24 = dma.hbm_to_vmem [thread:$0]  %s0, 64, %s22, [#allocation3]
    $region5: #{tpu_custom_call.1} parent=1 // pred_fallthru
      _
    // Predicated region
    $region6: #{tpu_custom_call.1} parent=1 // pred_check
      _
    $region7: #{tpu_custom_call.1} parent=1 // pred_check_branch
      %26 = sbr.rel (0) target = $region9
    $region8: #{tpu_custom_call.1} parent=1 // pred_region
      %s28 = ssub.s32 1024, 1024
      %29 = vsyncadd [#allocation6], %s28
      %s30 = sshll.u32 [#allocation5], 4
      %s31 = int_to_ptr.vmem [resolvable:$true] %s30
      %36 = dma.hbm_to_vmem [thread:$0]  %s1, 1024, %s31, [#allocation6], 64, 64, 4
    $region9: #{tpu_custom_call.1} parent=1 // pred_fallthru
      _
    // Predicated region
    $region10: #{tpu_custom_call.1} parent=1 // pred_check
      _
    $region11: #{tpu_custom_call.1} parent=1 // pred_check_branch
      %38 = sbr.rel (0) target = $region13
    $region12: #{tpu_custom_call.1} parent=1 // pred_region
      %s40 = ssub.s32 1024, 1024
      %41 = vsyncadd [#allocation6], %s40
      %s42 = sshll.u32 [#allocation7], 4
      %s43 = int_to_ptr.vmem [resolvable:$true] %s42
      %48 = dma.hbm_to_vmem [thread:$0]  %s2, 1024, %s43, [#allocation6], 64, 64, 4
    $region13: #{tpu_custom_call.1} parent=1 // pred_fallthru
      _
    // Predicated region
    $region14: #{tpu_custom_call.1} parent=1 // pred_check
      _
    $region15: #{tpu_custom_call.1} parent=1 // pred_check_branch
      %50 = sbr.rel (0) target = $region17
    $region16: #{tpu_custom_call.1} parent=1 // pred_region
      %s52 = ssub.s32 1024, 1024
      %53 = vsyncadd [#allocation9], %s52
      %s54 = sshll.u32 [#allocation8], 4
      %s55 = int_to_ptr.vmem [resolvable:$true] %s54
      %60 = dma.hbm_to_vmem [thread:$0]  %s3, 1024, %s55, [#allocation9], 64, 64, 4
    $region17: #{tpu_custom_call.1} parent=1 // pred_fallthru
      _
    // Predicated region
    $region18: #{tpu_custom_call.1} parent=1 // pred_check
      _
    $region19: #{tpu_custom_call.1} parent=1 // pred_check_branch
      %62 = sbr.rel (0) target = $region21
    $region20: #{tpu_custom_call.1} parent=1 // pred_region
      %s64 = ssub.s32 1024, 1024
      %65 = vsyncadd [#allocation9], %s64
      %s66 = sshll.u32 [#allocation10], 4
      %s67 = int_to_ptr.vmem [resolvable:$true] %s66
      %72 = dma.hbm_to_vmem [thread:$0]  %s4, 1024, %s67, [#allocation9], 64, 64, 4
    $region21: #{tpu_custom_call.1} parent=1 // pred_fallthru
      _
    // Predicated region
    $region22: #{tpu_custom_call.1} parent=1 // pred_check
      _
    $region23: #{tpu_custom_call.1} parent=1 // pred_check_branch
      %74 = sbr.rel (0) target = $region25
    $region24: #{tpu_custom_call.1} parent=1 // pred_region
      _
    $region25: #{tpu_custom_call.1} parent=1 // pred_fallthru
      _
    // Predicated region
    $region26: #{tpu_custom_call.1} parent=1 // pred_check
      _
    $region27: #{tpu_custom_call.1} parent=1 // pred_check_branch
      %76 = sbr.rel (0) target = $region29
    $region28: #{tpu_custom_call.1} parent=1 // pred_region
      %77 = dma.done [#allocation3], 64
    $region29: #{tpu_custom_call.1} parent=1 // pred_fallthru
      _
    // Predicated region
    $region30: #{tpu_custom_call.1} parent=1 // pred_check
      _
    $region31: #{tpu_custom_call.1} parent=1 // pred_check_branch
      %79 = sbr.rel (0) target = $region33
    $region32: #{tpu_custom_call.1} parent=1 // pred_region
      %80 = dma.done [#allocation6], 1024
    $region33: #{tpu_custom_call.1} parent=1 // pred_fallthru
      _
    // Predicated region
    $region34: #{tpu_custom_call.1} parent=1 // pred_check
      _
    $region35: #{tpu_custom_call.1} parent=1 // pred_check_branch
      %82 = sbr.rel (0) target = $region37
    $region36: #{tpu_custom_call.1} parent=1 // pred_region
      %83 = dma.done [#allocation6], 1024
    $region37: #{tpu_custom_call.1} parent=1 // pred_fallthru
      _
    // Predicated region
    $region38: #{tpu_custom_call.1} parent=1 // pred_check
      _
    $region39: #{tpu_custom_call.1} parent=1 // pred_check_branch
      %85 = sbr.rel (0) target = $region41
    $region40: #{tpu_custom_call.1} parent=1 // pred_region
      %86 = dma.done [#allocation9], 1024
    $region41: #{tpu_custom_call.1} parent=1 // pred_fallthru
      _
    // Predicated region
    $region42: #{tpu_custom_call.1} parent=1 // pred_check
      _
    $region43: #{tpu_custom_call.1} parent=1 // pred_check_branch
      %88 = sbr.rel (0) target = $region45
    $region44: #{tpu_custom_call.1} parent=1 // pred_region
      %89 = dma.done [#allocation9], 1024
    $region45: #{tpu_custom_call.1} parent=1 // pred_fallthru
      _
    %v91 = vld [vmem:[%s5] sm:$0xff]
    %v92 = vld [vmem:[#allocation2] sm:$0xf]
    %v93 = vld [vmem:[#allocation5] sm:$0xf]
    %v94 = vld [vmem:[#allocation5 + $0x4] sm:$0xf]
    %v95 = vld [vmem:[#allocation5 + $0x8] sm:$0xf]
    %v96 = vld [vmem:[#allocation5 + $0xc] sm:$0xf]
    %v97 = vld [vmem:[#allocation5 + $0x10] sm:$0xf]
    %v98 = vld [vmem:[#allocation5 + $0x14] sm:$0xf]
    %v99 = vld [vmem:[#allocation5 + $0x18] sm:$0xf]
    %v100 = vld [vmem:[#allocation5 + $0x1c] sm:$0xf]
    %v101 = vld [vmem:[#allocation5 + $0x20] sm:$0xf]
    %v102 = vld [vmem:[#allocation5 + $0x24] sm:$0xf]
    %v103 = vld [vmem:[#allocation5 + $0x28] sm:$0xf]
    %v104 = vld [vmem:[#allocation5 + $0x2c] sm:$0xf]
    %v105 = vld [vmem:[#allocation5 + $0x30] sm:$0xf]
    %v106 = vld [vmem:[#allocation5 + $0x34] sm:$0xf]
    %v107 = vld [vmem:[#allocation5 + $0x38] sm:$0xf]
    %v108 = vld [vmem:[#allocation5 + $0x3c] sm:$0xf]
    %v109 = vlaneseq
    %v110 = vshrl.u32 %v109, 7
    %v111 = vsub.s32 0, %v110
    %v112 = vrot.slane %v91, %v111
    %v129 = vunpack.c.l.b16 %v93
    %v130 = vunpack.c.l.b16 %v94
    %v131 = vunpack.c.l.b16 %v95
    %v132 = vunpack.c.l.b16 %v96
    %v133 = vunpack.c.l.b16 %v97
    %v134 = vunpack.c.l.b16 %v98
    %v135 = vunpack.c.l.b16 %v99
    %v136 = vunpack.c.l.b16 %v100
    %v137 = vunpack.c.l.b16 %v101
    %v138 = vunpack.c.l.b16 %v102
    %v139 = vunpack.c.l.b16 %v103
    %v140 = vunpack.c.l.b16 %v104
    %v141 = vunpack.c.l.b16 %v105
    %v142 = vunpack.c.l.b16 %v106
    %v143 = vunpack.c.l.b16 %v107
    %v144 = vunpack.c.l.b16 %v108
    %v145 = vpack.c.b16 %v130, %v129
    %v146 = vpack.c.b16 %v132, %v131
    %v147 = vpack.c.b16 %v134, %v133
    %v148 = vpack.c.b16 %v136, %v135
    %v149 = vpack.c.b16 %v138, %v137
    %v150 = vpack.c.b16 %v140, %v139
    %v151 = vpack.c.b16 %v142, %v141
    %v152 = vpack.c.b16 %v144, %v143
    %161 = vmatprep.subr.bf16.mxu0 0
    %162 = vmatpush1.bf16.msra.mxu0 %v152
    %163 = vmatprep.subr.bf16.mxu0 0
    %164 = vmatpush1.bf16.msra.mxu0 %v151
    %165 = vmatprep.subr.bf16.mxu0 0
    %166 = vmatpush1.bf16.msra.mxu0 %v150
    %167 = vmatprep.subr.bf16.mxu0 0
    %168 = vmatpush1.bf16.msra.mxu0 %v149
    %169 = vmatprep.subr.bf16.mxu0 0
    %170 = vmatpush1.bf16.msra.mxu0 %v148
    %171 = vmatprep.subr.bf16.mxu0 0
    %172 = vmatpush1.bf16.msra.mxu0 %v147
    %173 = vmatprep.subr.bf16.mxu0 0
    %174 = vmatpush1.bf16.msra.mxu0 %v146
    %175 = vmatprep.subr.bf16.mxu0 0
    %176 = vmatpush1.bf16.msra.mxu0 %v145
    %177 = vmatprep.subr.bf16.mxu0 0
    %178 = vmatpush2.bf16.msra.mxu0 0
    %179 = vmatprep.subr.bf16.mxu0 0
    %180 = vmatpush2.bf16.msra.mxu0 0
    %181 = vmatprep.subr.bf16.mxu0 0
    %182 = vmatpush2.bf16.msra.mxu0 0
    %183 = vmatprep.subr.bf16.mxu0 0
    %184 = vmatpush2.bf16.msra.mxu0 0
    %185 = vmatprep.subr.bf16.mxu0 0
    %186 = vmatpush2.bf16.msra.mxu0 0
    %187 = vmatprep.subr.bf16.mxu0 0
    %188 = vmatpush2.bf16.msra.mxu0 0
    %189 = vmatprep.subr.bf16.mxu0 0
    %190 = vmatpush2.bf16.msra.mxu0 0
    %191 = vmatprep.subr.bf16.mxu0 0
    %192 = vmatpush2.bf16.msra.mxu0 0
    %193 = vmatprep.mubr.bf16.mxu0 0
    %194 = vmatmul.mubr.bf16.gmra.mxu0 %v92
    %v195 = vpop.f32.mrf.mxu0
    %v196 = vadd.f32 %v112, %v195
    %v197 = vpop.f32.mrf.mxu0
    %v198 = vpop.f32.mrf.mxu0
    %v199 = vpop.f32.mrf.mxu0
    %200 = vdwg.mxu0
    %vm201 = vcmp.gt.f32.partialorder %v196, 0.0
    %v202 = vmul.f32 %v196, 0.1
    %v203 = vsel %vm201, %v196, %v202
    %v204 = vpack.c.bf16 %v203, %v203
    %v205 = vld [vmem:[#allocation7] sm:$0xf]
    %v206 = vld [vmem:[#allocation7 + $0x4] sm:$0xf]
    %v207 = vld [vmem:[#allocation7 + $0x8] sm:$0xf]
    %v208 = vld [vmem:[#allocation7 + $0xc] sm:$0xf]
    %v209 = vld [vmem:[#allocation7 + $0x10] sm:$0xf]
    %v210 = vld [vmem:[#allocation7 + $0x14] sm:$0xf]
    %v211 = vld [vmem:[#allocation7 + $0x18] sm:$0xf]
    %v212 = vld [vmem:[#allocation7 + $0x1c] sm:$0xf]
    %v213 = vld [vmem:[#allocation7 + $0x20] sm:$0xf]
    %v214 = vld [vmem:[#allocation7 + $0x24] sm:$0xf]
    %v215 = vld [vmem:[#allocation7 + $0x28] sm:$0xf]
    %v216 = vld [vmem:[#allocation7 + $0x2c] sm:$0xf]
    %v217 = vld [vmem:[#allocation7 + $0x30] sm:$0xf]
    %v218 = vld [vmem:[#allocation7 + $0x34] sm:$0xf]
    %v219 = vld [vmem:[#allocation7 + $0x38] sm:$0xf]
    %v220 = vld [vmem:[#allocation7 + $0x3c] sm:$0xf]
    %v221 = vlaneseq
    %v222 = vshrl.u32 %v221, 7
    %v223 = vsub.s32 1, %v222
    %v224 = vrot.slane %v91, %v223
    %v241 = vunpack.c.l.b16 %v205
    %v242 = vunpack.c.l.b16 %v206
    %v243 = vunpack.c.l.b16 %v207
    %v244 = vunpack.c.l.b16 %v208
    %v245 = vunpack.c.l.b16 %v209
    %v246 = vunpack.c.l.b16 %v210
    %v247 = vunpack.c.l.b16 %v211
    %v248 = vunpack.c.l.b16 %v212
    %v249 = vunpack.c.l.b16 %v213
    %v250 = vunpack.c.l.b16 %v214
    %v251 = vunpack.c.l.b16 %v215
    %v252 = vunpack.c.l.b16 %v216
    %v253 = vunpack.c.l.b16 %v217
    %v254 = vunpack.c.l.b16 %v218
    %v255 = vunpack.c.l.b16 %v219
    %v256 = vunpack.c.l.b16 %v220
    %v257 = vpack.c.b16 %v242, %v241
    %v258 = vpack.c.b16 %v244, %v243
    %v259 = vpack.c.b16 %v246, %v245
    %v260 = vpack.c.b16 %v248, %v247
    %v261 = vpack.c.b16 %v250, %v249
    %v262 = vpack.c.b16 %v252, %v251
    %v263 = vpack.c.b16 %v254, %v253
    %v264 = vpack.c.b16 %v256, %v255
    %273 = vmatprep.subr.bf16.mxu0 0
    %274 = vmatpush1.bf16.msra.mxu0 %v264
    %275 = vmatprep.subr.bf16.mxu0 0
    %276 = vmatpush1.bf16.msra.mxu0 %v263
    %277 = vmatprep.subr.bf16.mxu0 0
    %278 = vmatpush1.bf16.msra.mxu0 %v262
    %279 = vmatprep.subr.bf16.mxu0 0
    %280 = vmatpush1.bf16.msra.mxu0 %v261
    %281 = vmatprep.subr.bf16.mxu0 0
    %282 = vmatpush1.bf16.msra.mxu0 %v260
    %283 = vmatprep.subr.bf16.mxu0 0
    %284 = vmatpush1.bf16.msra.mxu0 %v259
    %285 = vmatprep.subr.bf16.mxu0 0
    %286 = vmatpush1.bf16.msra.mxu0 %v258
    %287 = vmatprep.subr.bf16.mxu0 0
    %288 = vmatpush1.bf16.msra.mxu0 %v257
    %289 = vmatprep.subr.bf16.mxu0 0
    %290 = vmatpush2.bf16.msra.mxu0 0
    %291 = vmatprep.subr.bf16.mxu0 0
    %292 = vmatpush2.bf16.msra.mxu0 0
    %293 = vmatprep.subr.bf16.mxu0 0
    %294 = vmatpush2.bf16.msra.mxu0 0
    %295 = vmatprep.subr.bf16.mxu0 0
    %296 = vmatpush2.bf16.msra.mxu0 0
    %297 = vmatprep.subr.bf16.mxu0 0
    %298 = vmatpush2.bf16.msra.mxu0 0
    %299 = vmatprep.subr.bf16.mxu0 0
    %300 = vmatpush2.bf16.msra.mxu0 0
    %301 = vmatprep.subr.bf16.mxu0 0
    %302 = vmatpush2.bf16.msra.mxu0 0
    %303 = vmatprep.subr.bf16.mxu0 0
    %304 = vmatpush2.bf16.msra.mxu0 0
    %305 = vmatprep.mubr.bf16.mxu0 0
    %306 = vmatmul.mubr.bf16.gmra.mxu0 %v204
    %v307 = vpop.f32.mrf.mxu0
    %v308 = vadd.f32 %v224, %v307
    %v309 = vpop.f32.mrf.mxu0
    %v310 = vpop.f32.mrf.mxu0
    %v311 = vpop.f32.mrf.mxu0
    %312 = vdwg.mxu0
    %vm313 = vcmp.gt.f32.partialorder %v308, 0.0
    %v314 = vmul.f32 %v308, 0.1
    %v315 = vsel %vm313, %v308, %v314
    %v316 = vpack.c.bf16 %v315, %v315
    %v317 = vld [vmem:[#allocation8] sm:$0xf]
    %v318 = vld [vmem:[#allocation8 + $0x4] sm:$0xf]
    %v319 = vld [vmem:[#allocation8 + $0x8] sm:$0xf]
    %v320 = vld [vmem:[#allocation8 + $0xc] sm:$0xf]
    %v321 = vld [vmem:[#allocation8 + $0x10] sm:$0xf]
    %v322 = vld [vmem:[#allocation8 + $0x14] sm:$0xf]
    %v323 = vld [vmem:[#allocation8 + $0x18] sm:$0xf]
    %v324 = vld [vmem:[#allocation8 + $0x1c] sm:$0xf]
    %v325 = vld [vmem:[#allocation8 + $0x20] sm:$0xf]
    %v326 = vld [vmem:[#allocation8 + $0x24] sm:$0xf]
    %v327 = vld [vmem:[#allocation8 + $0x28] sm:$0xf]
    %v328 = vld [vmem:[#allocation8 + $0x2c] sm:$0xf]
    %v329 = vld [vmem:[#allocation8 + $0x30] sm:$0xf]
    %v330 = vld [vmem:[#allocation8 + $0x34] sm:$0xf]
    %v331 = vld [vmem:[#allocation8 + $0x38] sm:$0xf]
    %v332 = vld [vmem:[#allocation8 + $0x3c] sm:$0xf]
    %v333 = vlaneseq
    %v334 = vshrl.u32 %v333, 7
    %v335 = vsub.s32 2, %v334
    %v336 = vrot.slane %v91, %v335
    %v353 = vunpack.c.l.b16 %v317
    %v354 = vunpack.c.l.b16 %v318
    %v355 = vunpack.c.l.b16 %v319
    %v356 = vunpack.c.l.b16 %v320
    %v357 = vunpack.c.l.b16 %v321
    %v358 = vunpack.c.l.b16 %v322
    %v359 = vunpack.c.l.b16 %v323
    %v360 = vunpack.c.l.b16 %v324
    %v361 = vunpack.c.l.b16 %v325
    %v362 = vunpack.c.l.b16 %v326
    %v363 = vunpack.c.l.b16 %v327
    %v364 = vunpack.c.l.b16 %v328
    %v365 = vunpack.c.l.b16 %v329
    %v366 = vunpack.c.l.b16 %v330
    %v367 = vunpack.c.l.b16 %v331
    %v368 = vunpack.c.l.b16 %v332
    %v369 = vpack.c.b16 %v354, %v353
    %v370 = vpack.c.b16 %v356, %v355
    %v371 = vpack.c.b16 %v358, %v357
    %v372 = vpack.c.b16 %v360, %v359
    %v373 = vpack.c.b16 %v362, %v361
    %v374 = vpack.c.b16 %v364, %v363
    %v375 = vpack.c.b16 %v366, %v365
    %v376 = vpack.c.b16 %v368, %v367
    %385 = vmatprep.subr.bf16.mxu0 0
    %386 = vmatpush1.bf16.msra.mxu0 %v376
    %387 = vmatprep.subr.bf16.mxu0 0
    %388 = vmatpush1.bf16.msra.mxu0 %v375
    %389 = vmatprep.subr.bf16.mxu0 0
    %390 = vmatpush1.bf16.msra.mxu0 %v374
    %391 = vmatprep.subr.bf16.mxu0 0
    %392 = vmatpush1.bf16.msra.mxu0 %v373
    %393 = vmatprep.subr.bf16.mxu0 0
    %394 = vmatpush1.bf16.msra.mxu0 %v372
    %395 = vmatprep.subr.bf16.mxu0 0
    %396 = vmatpush1.bf16.msra.mxu0 %v371
    %397 = vmatprep.subr.bf16.mxu0 0
    %398 = vmatpush1.bf16.msra.mxu0 %v370
    %399 = vmatprep.subr.bf16.mxu0 0
    %400 = vmatpush1.bf16.msra.mxu0 %v369
    %401 = vmatprep.subr.bf16.mxu0 0
    %402 = vmatpush2.bf16.msra.mxu0 0
    %403 = vmatprep.subr.bf16.mxu0 0
    %404 = vmatpush2.bf16.msra.mxu0 0
    %405 = vmatprep.subr.bf16.mxu0 0
    %406 = vmatpush2.bf16.msra.mxu0 0
    %407 = vmatprep.subr.bf16.mxu0 0
    %408 = vmatpush2.bf16.msra.mxu0 0
    %409 = vmatprep.subr.bf16.mxu0 0
    %410 = vmatpush2.bf16.msra.mxu0 0
    %411 = vmatprep.subr.bf16.mxu0 0
    %412 = vmatpush2.bf16.msra.mxu0 0
    %413 = vmatprep.subr.bf16.mxu0 0
    %414 = vmatpush2.bf16.msra.mxu0 0
    %415 = vmatprep.subr.bf16.mxu0 0
    %416 = vmatpush2.bf16.msra.mxu0 0
    %417 = vmatprep.mubr.bf16.mxu0 0
    %418 = vmatmul.mubr.bf16.gmra.mxu0 %v316
    %v419 = vpop.f32.mrf.mxu0
    %v420 = vadd.f32 %v336, %v419
    %v421 = vpop.f32.mrf.mxu0
    %v422 = vpop.f32.mrf.mxu0
    %v423 = vpop.f32.mrf.mxu0
    %424 = vdwg.mxu0
    %vm425 = vcmp.gt.f32.partialorder %v420, 0.0
    %v426 = vmul.f32 %v420, 0.1
    %v427 = vsel %vm425, %v420, %v426
    %v428 = vpack.c.bf16 %v427, %v427
    %v429 = vld [vmem:[#allocation10] sm:$0xf]
    %v430 = vld [vmem:[#allocation10 + $0x4] sm:$0xf]
    %v431 = vld [vmem:[#allocation10 + $0x8] sm:$0xf]
    %v432 = vld [vmem:[#allocation10 + $0xc] sm:$0xf]
    %v433 = vld [vmem:[#allocation10 + $0x10] sm:$0xf]
    %v434 = vld [vmem:[#allocation10 + $0x14] sm:$0xf]
    %v435 = vld [vmem:[#allocation10 + $0x18] sm:$0xf]
    %v436 = vld [vmem:[#allocation10 + $0x1c] sm:$0xf]
    %v437 = vld [vmem:[#allocation10 + $0x20] sm:$0xf]
    %v438 = vld [vmem:[#allocation10 + $0x24] sm:$0xf]
    %v439 = vld [vmem:[#allocation10 + $0x28] sm:$0xf]
    %v440 = vld [vmem:[#allocation10 + $0x2c] sm:$0xf]
    %v441 = vld [vmem:[#allocation10 + $0x30] sm:$0xf]
    %v442 = vld [vmem:[#allocation10 + $0x34] sm:$0xf]
    %v443 = vld [vmem:[#allocation10 + $0x38] sm:$0xf]
    %v444 = vld [vmem:[#allocation10 + $0x3c] sm:$0xf]
    %v445 = vlaneseq
    %v446 = vshrl.u32 %v445, 7
    %v447 = vsub.s32 3, %v446
    %v448 = vrot.slane %v91, %v447
    %v465 = vunpack.c.l.b16 %v429
    %v466 = vunpack.c.l.b16 %v430
    %v467 = vunpack.c.l.b16 %v431
    %v468 = vunpack.c.l.b16 %v432
    %v469 = vunpack.c.l.b16 %v433
    %v470 = vunpack.c.l.b16 %v434
    %v471 = vunpack.c.l.b16 %v435
    %v472 = vunpack.c.l.b16 %v436
    %v473 = vunpack.c.l.b16 %v437
    %v474 = vunpack.c.l.b16 %v438
    %v475 = vunpack.c.l.b16 %v439
    %v476 = vunpack.c.l.b16 %v440
    %v477 = vunpack.c.l.b16 %v441
    %v478 = vunpack.c.l.b16 %v442
    %v479 = vunpack.c.l.b16 %v443
    %v480 = vunpack.c.l.b16 %v444
    %v481 = vpack.c.b16 %v466, %v465
    %v482 = vpack.c.b16 %v468, %v467
    %v483 = vpack.c.b16 %v470, %v469
    %v484 = vpack.c.b16 %v472, %v471
    %v485 = vpack.c.b16 %v474, %v473
    %v486 = vpack.c.b16 %v476, %v475
    %v487 = vpack.c.b16 %v478, %v477
    %v488 = vpack.c.b16 %v480, %v479
    %497 = vmatprep.subr.bf16.mxu0 0
    %498 = vmatpush1.bf16.msra.mxu0 %v488
    %499 = vmatprep.subr.bf16.mxu0 0
    %500 = vmatpush1.bf16.msra.mxu0 %v487
    %501 = vmatprep.subr.bf16.mxu0 0
    %502 = vmatpush1.bf16.msra.mxu0 %v486
    %503 = vmatprep.subr.bf16.mxu0 0
    %504 = vmatpush1.bf16.msra.mxu0 %v485
    %505 = vmatprep.subr.bf16.mxu0 0
    %506 = vmatpush1.bf16.msra.mxu0 %v484
    %507 = vmatprep.subr.bf16.mxu0 0
    %508 = vmatpush1.bf16.msra.mxu0 %v483
    %509 = vmatprep.subr.bf16.mxu0 0
    %510 = vmatpush1.bf16.msra.mxu0 %v482
    %511 = vmatprep.subr.bf16.mxu0 0
    %512 = vmatpush1.bf16.msra.mxu0 %v481
    %513 = vmatprep.subr.bf16.mxu0 0
    %514 = vmatpush2.bf16.msra.mxu0 0
    %515 = vmatprep.subr.bf16.mxu0 0
    %516 = vmatpush2.bf16.msra.mxu0 0
    %517 = vmatprep.subr.bf16.mxu0 0
    %518 = vmatpush2.bf16.msra.mxu0 0
    %519 = vmatprep.subr.bf16.mxu0 0
    %520 = vmatpush2.bf16.msra.mxu0 0
    %521 = vmatprep.subr.bf16.mxu0 0
    %522 = vmatpush2.bf16.msra.mxu0 0
    %523 = vmatprep.subr.bf16.mxu0 0
    %524 = vmatpush2.bf16.msra.mxu0 0
    %525 = vmatprep.subr.bf16.mxu0 0
    %526 = vmatpush2.bf16.msra.mxu0 0
    %527 = vmatprep.subr.bf16.mxu0 0
    %528 = vmatpush2.bf16.msra.mxu0 0
    %529 = vmatprep.mubr.bf16.mxu0 0
    %530 = vmatmul.mubr.bf16.gmra.mxu0 %v428
    %v531 = vpop.f32.mrf.mxu0
    %v532 = vadd.f32 %v448, %v531
    %v533 = vpop.f32.mrf.mxu0
    %v534 = vpop.f32.mrf.mxu0
    %v535 = vpop.f32.mrf.mxu0
    %536 = vdwg.mxu0
    %537 = vst [vmem:[#allocation11] sm:$0xff] %v532
    // Predicated region
    $region46: #{tpu_custom_call.1} parent=1 // pred_check
      _
    $region47: #{tpu_custom_call.1} parent=1 // pred_check_branch
      %539 = sbr.rel (0) target = $region49
    $region48: #{tpu_custom_call.1} parent=1 // pred_region
      %s541 = ssub.s32 128, 128
      %542 = vsyncadd [#allocation4], %s541
      %s544 = sshll.u32 [#allocation11], 4
      %s545 = int_to_ptr.vmem [resolvable:$true] %s544
      %547 = dma.vmem_to_hbm [thread:$0]  %s545, 128, %s6, [#allocation4]
    $region49: #{tpu_custom_call.1} parent=1 // pred_fallthru
      _
    // Predicated region
    $region50: #{tpu_custom_call.1} parent=1 // pred_check
      _
    $region51: #{tpu_custom_call.1} parent=1 // pred_check_branch
      %549 = sbr.rel (0) target = $region53
    $region52: #{tpu_custom_call.1} parent=1 // pred_region
      %550 = dma.done [#allocation4], 128
    $region53: #{tpu_custom_call.1} parent=1 // pred_fallthru
      _
    %551 = vsyncpa [#allocation3], 1
    %552 = vsyncpa [#allocation6], 1
    %553 = vsyncpa [#allocation9], 1
    %554 = vsyncpa [#allocation4], 1

</llo_original>
